<compile_context>
chip_gen: v5e
topology: v5e:2x2
jax: 0.10.0
libtpu: 0.0.40
codegen_flags: <defaults>
</compile_context>

<pallas_src>
import functools

import jax
import jax.numpy as jnp
from jax.experimental import pallas as pl
from jax.experimental.pallas import tpu as pltpu


_TARGET_TILE_BYTES = 6 * 1024 * 1024    # per input block (Pallas double-buffers it)
_VMEM_LIMIT_BYTES = 32 * 1024 * 1024    # explicit scoped-VMEM limit (safe on v5e/v6e/v7x)


def _gap_kernel(x_ref, o_ref, acc_ref, *, inv_l):
    # x_ref:   (TR, TL) one row-block x one reduction-chunk.
    # o_ref:   (TR, 1)  row means (written on the last reduction step).
    # acc_ref: (TR, 1)  f32 accumulator, persistent across the reduction axis.
    k = pl.program_id(1)

    @pl.when(k == 0)
    def _init():
        acc_ref[...] = jnp.zeros_like(acc_ref)

    # Accumulate in f32 without materializing an f32 copy of the whole tile.
    acc_ref[...] += jnp.sum(x_ref[...], axis=-1, keepdims=True, dtype=jnp.float32)

    @pl.when(k == pl.num_programs(1) - 1)
    def _finalize():
        o_ref[...] = (acc_ref[...] * inv_l).astype(o_ref.dtype)


def _largest_aligned_divisor(total, align, upper):
    """Largest d with d % align == 0, total % d == 0, d <= upper (assumes total % align == 0)."""
    upper = min(int(upper), total)
    if upper < align:
        return align
    best = align
    for d in range(align, upper + 1, align):
        if total % d == 0:
            best = d
    return best


def global_avg_pool2d(x, *, min_pallas_bytes=1 << 20):
    """Equivalent of GlobalAvgPool2d().forward(x) for NCHW input -> (N, C)."""
    N, C, H, W = x.shape
    R = N * C
    L = H * W
    itemsize = jnp.dtype(x.dtype).itemsize

    # Tiny inputs are entirely launch-bound: plain XLA mean is cheaper.
    if min_pallas_bytes and R * L * itemsize < min_pallas_bytes:
        return jnp.mean(x, axis=(2, 3)).astype(x.dtype)

    # Sublane packing per dtype (f32: 8, bf16/f16: 16, int8/fp8: 32).
    packing = {1: 32, 2: 16}.get(itemsize, 8)
    # Real per-row VMEM lane footprint (lanes pad to 128 even when L < 128).
    lanes_padded = max(128, ((L + 127) // 128) * 128)
    row_bytes = lanes_padded * itemsize

    # Flatten: rows = (n, c) pairs, lanes = flattened spatial (no-copy reshape).
    x2 = x.reshape(R, L)

    # Only ever pad the row axis by < packing rows (rare; padded rows reduce
    # independently and are sliced off).  Never pad up to a multiple of tr.
    r_pad = ((R + packing - 1) // packing) * packing
    if r_pad != R:
        x2 = jnp.pad(x2, ((0, r_pad - R), (0, 0)))

    if packing * row_bytes <= _TARGET_TILE_BYTES:
        # Case A: full reduction axis in one block; tile only rows.
        tl, nk = L, 1
        upper = _TARGET_TILE_BYTES // row_bytes
        if r_pad >= 2 * packing:
            # Prefer >= 2 grid steps so the parallel axis can shard across 2 TCs.
            upper = min(upper, max(packing, r_pad // 2))
        tr = _largest_aligned_divisor(r_pad, packing, upper)
    else:
        # Case B: a full row exceeds the tile budget -> tile the reduction axis
        # with 128-aligned chunks that divide L exactly (no garbage in the sum).
        if L % 128 != 0:
            # TODO(synk): masked/segmented L-tiling for huge non-128-aligned H*W
            # is not implemented; fall back to XLA mean for that edge case.
            return jnp.mean(x, axis=(2, 3)).astype(x.dtype)
        tl = _largest_aligned_divisor(L, 128, _TARGET_TILE_BYTES // (packing * itemsize))
        nk = L // tl
        tr = _largest_aligned_divisor(r_pad, packing, _TARGET_TILE_BYTES // (tl * itemsize))

    nr = r_pad // tr

    kernel = functools.partial(_gap_kernel, inv_l=1.0 / float(L))

    out = pl.pallas_call(
        kernel,
        out_shape=jax.ShapeDtypeStruct((r_pad, 1), x.dtype),
        grid=(nr, nk),
        in_specs=[pl.BlockSpec((tr, tl), lambda i, k: (i, k))],
        out_specs=pl.BlockSpec((tr, 1), lambda i, k: (i, 0)),
        scratch_shapes=[pltpu.VMEM((tr, 1), jnp.float32)],
        compiler_params=pltpu.CompilerParams(
            dimension_semantics=("parallel", "arbitrary"),
            vmem_limit_bytes=_VMEM_LIMIT_BYTES,
        ),
        cost_estimate=pl.CostEstimate(
            flops=R * L,
            transcendentals=0,
            bytes_accessed=R * L * itemsize + R * itemsize,
        ),
    )(x2)

    return out[:R, 0].reshape(N, C)


if __name__ == "__main__":
    key = jax.random.PRNGKey(0)

    # Shape implied by the module's usage (NCHW).
    N, C, H, W = 2, 4, 16, 16
    x = jax.random.normal(key, (N, C, H, W), dtype=jnp.float32)

    # Force the Pallas path (the default would route this launch-bound tiny
    # input to the XLA-mean fallback).
    out = global_avg_pool2d(x, min_pallas_bytes=0)
    out = jax.block_until_ready(out)

    ref = jnp.mean(x, axis=(2, 3))
    assert out.shape == (N, C), out.shape
    assert out.dtype == x.dtype
    assert jnp.allclose(out, ref, atol=1e-5, rtol=1e-5), "mismatch vs mean reference"

    # Larger input: exercises the multi-row-block (2-step parallel grid) path.
    x_big = jax.random.normal(jax.random.PRNGKey(1), (4, 64, 32, 32), dtype=jnp.float32)
    out_big = jax.block_until_ready(global_avg_pool2d(x_big, min_pallas_bytes=0))
    ref_big = jnp.mean(x_big, axis=(2, 3))
    assert out_big.shape == (4, 64)
    assert jnp.allclose(out_big, ref_big, atol=1e-5, rtol=1e-5), "mismatch (large shape)"

    print("KERNEL_OK")
</pallas_src>

<mosaic_0001>
module attributes {stable_mosaic.version = 11 : i64} {
  func.func @_gap_kernel(%arg0: i32, %arg1: i32, %arg2: memref<8x256xf32, #tpu.memory_space<vmem>>, %arg3: memref<8x1xf32, #tpu.memory_space<vmem>>, %arg4: memref<8x1xf32, #tpu.memory_space<vmem>>) attributes {dimension_semantics = [#tpu.dimension_semantics<parallel>, #tpu.dimension_semantics<arbitrary>], iteration_bounds = array<i64: 1, 1>, scalar_prefetch = 0 : i64, scratch_operands = 1 : i64, tpu.core_type = #tpu.core_type<tc>, window_params = [{transform_indices = @transform_0, window_bounds = array<i64: 8, 256>}, {transform_indices = @transform_1, window_bounds = array<i64: 8, 1>}]} {
    %c0_i32 = arith.constant 0 : i32
    %0 = arith.cmpi eq, %arg1, %c0_i32 : i32
    %1 = arith.extui %0 : i1 to i32
    %c0_i32_0 = arith.constant 0 : i32
    %2 = arith.cmpi ne, %1, %c0_i32_0 : i32
    scf.if %2 {
      %cst_8 = arith.constant 0.000000e+00 : f32
      %12 = vector.broadcast %cst_8 : f32 to vector<8x1xf32>
      %c0_9 = arith.constant 0 : index
      %c0_10 = arith.constant 0 : index
      %13 = vector.load %arg4[%c0_9, %c0_10] : memref<8x1xf32, #tpu.memory_space<vmem>>, vector<8x1xf32>
      tpu.vector_store %arg4[%c0_9, %c0_10], %12 {strides = array<i32>} : memref<8x1xf32, #tpu.memory_space<vmem>>, vector<8x1xf32>,
    } else {
    }
    %c0 = arith.constant 0 : index
    %c0_1 = arith.constant 0 : index
    %3 = vector.load %arg4[%c0, %c0_1] : memref<8x1xf32, #tpu.memory_space<vmem>>, vector<8x1xf32>
    %c0_2 = arith.constant 0 : index
    %c0_3 = arith.constant 0 : index
    %4 = vector.load %arg2[%c0_2, %c0_3] : memref<8x256xf32, #tpu.memory_space<vmem>>, vector<8x256xf32>
    %cst = arith.constant dense<0.000000e+00> : vector<8xf32>
    %5 = vector.multi_reduction <add>, %4, %cst [1] : vector<8x256xf32> to vector<8xf32>
    %6 = vector.shape_cast %5 : vector<8xf32> to vector<8x1xf32>
    %7 = arith.addf %3, %6 : vector<8x1xf32>
    %c0_4 = arith.constant 0 : index
    %c0_5 = arith.constant 0 : index
    %8 = vector.load %arg4[%c0_4, %c0_5] : memref<8x1xf32, #tpu.memory_space<vmem>>, vector<8x1xf32>
    tpu.vector_store %arg4[%c0_4, %c0_5], %7 {strides = array<i32>} : memref<8x1xf32, #tpu.memory_space<vmem>>, vector<8x1xf32>,
    %c0_i32_6 = arith.constant 0 : i32
    %9 = arith.cmpi eq, %arg1, %c0_i32_6 : i32
    %10 = arith.extui %9 : i1 to i32
    %c0_i32_7 = arith.constant 0 : i32
    %11 = arith.cmpi ne, %10, %c0_i32_7 : i32
    scf.if %11 {
      %c0_8 = arith.constant 0 : index
      %c0_9 = arith.constant 0 : index
      %12 = vector.load %arg4[%c0_8, %c0_9] : memref<8x1xf32, #tpu.memory_space<vmem>>, vector<8x1xf32>
      %cst_10 = arith.constant 3.906250e-03 : f32
      %13 = vector.broadcast %cst_10 : f32 to vector<8x1xf32>
      %14 = arith.mulf %12, %13 : vector<8x1xf32>
      %c0_11 = arith.constant 0 : index
      %c0_12 = arith.constant 0 : index
      %15 = vector.load %arg3[%c0_11, %c0_12] : memref<8x1xf32, #tpu.memory_space<vmem>>, vector<8x1xf32>
      tpu.vector_store %arg3[%c0_11, %c0_12], %14 {strides = array<i32>} : memref<8x1xf32, #tpu.memory_space<vmem>>, vector<8x1xf32>,
    } else {
    }
    return
  }
  func.func @transform_0(%arg0: i32, %arg1: i32) -> (i32, i32) {
    %c0_i32 = arith.constant 0 : i32
    return %arg0, %arg1 : i32, i32
  }
  func.func @transform_1(%arg0: i32, %arg1: i32) -> (i32, i32) {
    %c0_i32 = arith.constant 0 : i32
    %c0_i32_0 = arith.constant 0 : i32
    return %arg0, %c0_i32 : i32, i32
  }
}

</mosaic_0001>

<llo_original>
// kernel: tpu_custom_call.1
$region0: #{tpu_custom_call.1}
  #allocation0 [shape = 'u32[]', space=smem, size = 0x4, offset = 0x4, fixed_abs, tag = 'smem constant byte address 0x4 - core index']
  #allocation1 [shape = 'u32[72,128]{1,0:T(1,128)}', space=vmem, size = 0x9000, scoped, tag = 'internal scratch']
  #allocation2 [shape = 'f32[8,1]{1,0:T(8,128)}', space=vmem, size = 0x1000, scoped, tag = 'scratch operand']
  %s0 = inlined_call_operand.hbm [shape: f32[8,256], index: 0, kind: input, shape index: {}]
  %s1 = inlined_call_operand.vmem [shape: f32[8,1], index: 1, kind: output, shape index: {}]
  %s2 = sld [smem:[#allocation0]]
  $region26: #{tpu_custom_call.1} parent=0
    _
  %s4 = ssub.s32 1, %s2
  %s5 = scalar_select 0, %s4, %s2
  $region1: #{tpu_custom_call.1} parent=0
    #allocation3 [shape = 'u8[8192]{0}', space=vmem, size = 0x2000, scoped, tag = 'input window, operand 0, single buffered']
    #allocation4 [shape = 's32[1]{0}', space=sflag, size = 0x4, scoped, tag = 'scoped memory for tpu_custom_call.1']
    %6 = vsyncpa [#allocation4], 0
    // Predicated region
    $region2: #{tpu_custom_call.1} parent=1 // pred_check
      _
    $region3: #{tpu_custom_call.1} parent=1 // pred_check_branch
      %8 = sbr.rel (0) target = $region5
    $region4: #{tpu_custom_call.1} parent=1 // pred_region
      %10 = vsyncadd [#allocation4], 0
      %s12 = sshll.u32 %s0, 4
      %s13 = int_to_ptr.hbm [resolvable:$true] %s12
      %s14 = sshll.u32 [#allocation3], 4
      %s15 = int_to_ptr.vmem [resolvable:$true] %s14
      %17 = dma.hbm_to_vmem [thread:$0]  %s13, 256, %s15, [#allocation4]
    $region5: #{tpu_custom_call.1} parent=1 // pred_fallthru
      _
    // Predicated region
    $region6: #{tpu_custom_call.1} parent=1 // pred_check
      _
    $region7: #{tpu_custom_call.1} parent=1 // pred_check_branch
      %19 = sbr.rel (0) target = $region9
    $region8: #{tpu_custom_call.1} parent=1 // pred_region
      %21 = dma.done [#allocation4], 256
    $region9: #{tpu_custom_call.1} parent=1 // pred_fallthru
      _
    %p22 = scmp.eq.s32.totalorder 0, 0
    // Predicated region
    $region10: #{tpu_custom_call.1} parent=1 // pred_check
      %p23 = pneg %p22
    $region11: #{tpu_custom_call.1} parent=1 // pred_check_branch
      %25 = sbr.rel (%p23) target = $region13
    $region12: #{tpu_custom_call.1} parent=1 // pred_region
      %vm26 = vcmask 7168
      %27 = vst.msk [vmem:[#allocation2] sm:$0xff] %vm26, 0.0
    $region13: #{tpu_custom_call.1} parent=1 // pred_fallthru
      _
    %v28 = vld [vmem:[#allocation2] sm:$0xff]
    %v29 = vld [vmem:[#allocation3] sm:$0xff]
    %v30 = vld [vmem:[#allocation3 + $0x8] sm:$0xff]
    %v31 = vadd.f32 %v29, %v30
    %32 = vadd.xlane.f32.xlu0 %v31
    %v33 = vpop.xlane.xlu0 %32
    %v34 = vadd.f32 %v28, %v33
    %vm35 = vcmask 7168
    %36 = vst.msk [vmem:[#allocation2] sm:$0xff] %vm35, %v34
    // Predicated region
    $region14: #{tpu_custom_call.1} parent=1 // pred_check
      %p37 = pneg %p22
    $region15: #{tpu_custom_call.1} parent=1 // pred_check_branch
      %39 = sbr.rel (%p37) target = $region17
    $region16: #{tpu_custom_call.1} parent=1 // pred_region
      %v40 = vld [vmem:[#allocation2] sm:$0xff]
      %v41 = vmul.f32 %v40, 0.00390625
      %42 = vst.msk [vmem:[%s1] sm:$0xff] %vm35, %v41
    $region17: #{tpu_custom_call.1} parent=1 // pred_fallthru
      _
    // Predicated region
    $region18: #{tpu_custom_call.1} parent=1 // pred_check
      _
    $region19: #{tpu_custom_call.1} parent=1 // pred_check_branch
      %44 = sbr.rel (0) target = $region21
    $region20: #{tpu_custom_call.1} parent=1 // pred_region
      _
    $region21: #{tpu_custom_call.1} parent=1 // pred_fallthru
      _
    // Predicated region
    $region22: #{tpu_custom_call.1} parent=1 // pred_check
      _
    $region23: #{tpu_custom_call.1} parent=1 // pred_check_branch
      %46 = sbr.rel (0) target = $region25
    $region24: #{tpu_custom_call.1} parent=1 // pred_region
      _
    $region25: #{tpu_custom_call.1} parent=1 // pred_fallthru
      _
    %47 = vsyncpa [#allocation4], 1

</llo_original>
